<compile_context>
chip_gen: v7x
topology: tpu7x:2x2x1
jax: 0.10.0
libtpu: 0.0.40
codegen_flags: <defaults>
</compile_context>

<pallas_src>
import jax
import jax.numpy as jnp
from jax.experimental import pallas as pl
from jax.experimental.pallas import tpu as pltpu


def _map_encoder_kernel(x_ref, w1_ref, b1_ref, w2_ref, b2_ref, o_ref):
    # x_ref: (TM, 4)    w1_ref: (4, 64)    b1_ref: (1, 64)
    # w2_ref: (64, 128) b2_ref: (1, 128)   o_ref: (TM, 128)
    x = x_ref[...]
    w1 = w1_ref[...]

    # First layer on the VPU: K=4 contraction as broadcast multiply-adds.
    # (TM,1) * (1,64) broadcasts -> (TM,64); avoids an MXU matmul with a
    # nearly-empty contraction depth and the associated operand relayout.
    h = b1_ref[...] + x[:, 0:1] * w1[0:1, :]
    h = h + x[:, 1:2] * w1[1:2, :]
    h = h + x[:, 2:3] * w1[2:3, :]
    h = h + x[:, 3:4] * w1[3:4, :]
    h = jnp.maximum(h, 0.0)  # ReLU

    # Second layer (64 -> 128) on the MXU.  If the wrapper handed w2 in as
    # bf16 (opt-in fast path, mainly v7x), feed bf16 operands; the accumulate
    # stays f32 via preferred_element_type.
    if w2_ref.dtype == jnp.bfloat16:
        h = h.astype(jnp.bfloat16)
    y = jnp.dot(h, w2_ref[...], preferred_element_type=jnp.float32) + b2_ref[...]
    o_ref[...] = y.astype(o_ref.dtype)


def _round_up(n, m):
    return ((n + m - 1) // m) * m


def map_encoder_forward(x, w1, b1, w2, b2, *, tm=4096,
                        out_dtype=jnp.float32, mxu_bf16=False):
    """x: (..., 4) -> (..., 128).

    out_dtype=jnp.bfloat16 and mxu_bf16=True are opt-in perf paths that relax
    numerics; defaults preserve f32 parity with the PyTorch module.
    """
    lead_shape = x.shape[:-1]
    M = 1
    for d in lead_shape:
        M *= d
    x2 = x.reshape(M, 4).astype(jnp.float32)

    # Pad rows only up to the sublane multiple (8); the last grid block may be
    # partial and Pallas masks out-of-bounds rows on writeback.
    m_pad = _round_up(max(M, 1), 8)
    if m_pad != M:
        x2 = jnp.pad(x2, ((0, m_pad - M), (0, 0)))

    # Row tile.  VMEM (double buffered, lane-padded to 128 lanes, f32):
    #   x tile  : 128*4 B/row * 2 = 1 KiB/row
    #   out tile: 128*4 B/row * 2 = 1 KiB/row  (half that for bf16 out)
    # => ~2 KiB/row, so TM=4096 ~= 8 MiB — safe within the 16/32/32 MiB scoped
    # VMEM defaults of v5e/v6e/v7x without raising vmem_limit_bytes.
    tm_eff = _round_up(min(tm, m_pad), 8)
    # For large M, keep >= 8 grid steps so v7x's two TensorCores each get >= 4
    # pipelined steps; keep per-step rows >= 1024 so step overhead stays
    # amortized.  No-op on small M and harmless on 1-TC chips.
    if m_pad >= 8 * 1024:
        tm_eff = min(tm_eff, max(1024, _round_up(pl.cdiv(m_pad, 8), 8)))

    grid = (pl.cdiv(m_pad, tm_eff),)

    b1_2 = jnp.asarray(b1, jnp.float32).reshape(1, 64)
    b2_2 = jnp.asarray(b2, jnp.float32).reshape(1, 128)
    w1_2 = jnp.asarray(w1, jnp.float32).reshape(4, 64)
    w2_2 = jnp.asarray(w2).reshape(64, 128)
    w2_2 = w2_2.astype(jnp.bfloat16 if mxu_bf16 else jnp.float32)

    out_itemsize = jnp.dtype(out_dtype).itemsize
    cost = pl.CostEstimate(
        flops=2 * m_pad * (4 * 64 + 64 * 128),
        transcendentals=0,
        bytes_accessed=m_pad * (4 * 4 + 128 * out_itemsize)
        + (4 * 64 + 64 + 64 * 128 + 128) * 4,
    )

    out = pl.pallas_call(
        _map_encoder_kernel,
        out_shape=jax.ShapeDtypeStruct((m_pad, 128), out_dtype),
        grid_spec=pl.GridSpec(
            grid=grid,
            in_specs=[
                pl.BlockSpec((tm_eff, 4), lambda i: (i, 0)),   # streamed rows
                pl.BlockSpec((4, 64), lambda i: (0, 0)),       # resident weights
                pl.BlockSpec((1, 64), lambda i: (0, 0)),
                pl.BlockSpec((64, 128), lambda i: (0, 0)),
                pl.BlockSpec((1, 128), lambda i: (0, 0)),
            ],
            out_specs=pl.BlockSpec((tm_eff, 128), lambda i: (i, 0)),
        ),
        compiler_params=pltpu.CompilerParams(
            dimension_semantics=("parallel",),  # rows split across TCs on v7x
        ),
        cost_estimate=cost,
    )(x2, w1_2, b1_2, w2_2, b2_2)

    out = out[:M]
    return out.reshape(*lead_shape, 128)


def init_params(key):
    """Deterministic init mimicking nn.Linear's uniform(-1/sqrt(fan_in), +...)."""
    k1, k2, k3, k4 = jax.random.split(key, 4)
    bound1 = 1.0 / jnp.sqrt(4.0)
    bound2 = 1.0 / jnp.sqrt(64.0)
    # Stored pre-transposed: [in_features, out_features]
    w1 = jax.random.uniform(k1, (4, 64), jnp.float32, -bound1, bound1)
    b1 = jax.random.uniform(k2, (1, 64), jnp.float32, -bound1, bound1)
    w2 = jax.random.uniform(k3, (64, 128), jnp.float32, -bound2, bound2)
    b2 = jax.random.uniform(k4, (1, 128), jnp.float32, -bound2, bound2)
    return w1, b1, w2, b2


if __name__ == "__main__":
    key = jax.random.PRNGKey(0)
    k_in, k_p = jax.random.split(key)

    # Small shape consistent with the forward: (batch=2, seq=8, features=4)
    x = jax.random.normal(k_in, (2, 8, 4), jnp.float32)
    w1, b1, w2, b2 = init_params(k_p)

    # Default (strict f32) path — must match the PyTorch module exactly.
    y = map_encoder_forward(x, w1, b1, w2, b2)
    y = jax.block_until_ready(y)

    h_ref = jnp.maximum(x.reshape(-1, 4) @ w1 + b1, 0.0)
    y_ref = (h_ref @ w2 + b2).reshape(2, 8, 128)
    assert y.shape == (2, 8, 128)
    assert y.dtype == jnp.float32
    assert jnp.allclose(y, y_ref, atol=1e-5, rtol=1e-5)

    # Opt-in perf paths: bf16 writeback and bf16 MXU operands (loose checks).
    y_bf16_out = jax.block_until_ready(
        map_encoder_forward(x, w1, b1, w2, b2, out_dtype=jnp.bfloat16))
    assert y_bf16_out.shape == (2, 8, 128) and y_bf16_out.dtype == jnp.bfloat16
    assert bool(jnp.all(jnp.isfinite(y_bf16_out.astype(jnp.float32))))
    assert jnp.allclose(y_bf16_out.astype(jnp.float32), y_ref, atol=5e-2, rtol=5e-2)

    y_mxu_bf16 = jax.block_until_ready(
        map_encoder_forward(x, w1, b1, w2, b2, mxu_bf16=True))
    assert y_mxu_bf16.shape == (2, 8, 128) and y_mxu_bf16.dtype == jnp.float32
    assert jnp.allclose(y_mxu_bf16, y_ref, atol=1e-1, rtol=5e-2)

    print("KERNEL_OK")
</pallas_src>

<mosaic_0001>
module attributes {stable_mosaic.version = 11 : i64} {
  func.func @_map_encoder_kernel(%arg0: i32, %arg1: memref<16x4xf32, #tpu.memory_space<vmem>>, %arg2: memref<4x64xf32, #tpu.memory_space<vmem>>, %arg3: memref<1x64xf32, #tpu.memory_space<vmem>>, %arg4: memref<64x128xf32, #tpu.memory_space<vmem>>, %arg5: memref<1x128xf32, #tpu.memory_space<vmem>>, %arg6: memref<16x128xf32, #tpu.memory_space<vmem>>) attributes {dimension_semantics = [#tpu.dimension_semantics<parallel>], iteration_bounds = array<i64: 1>, scalar_prefetch = 0 : i64, scratch_operands = 0 : i64, tpu.core_type = #tpu.core_type<tc>, window_params = [{transform_indices = @transform_0, window_bounds = array<i64: 16, 4>}, {pipeline_mode = #tpu.pipeline_mode<synchronous>, transform_indices = @transform_1, window_bounds = array<i64: 4, 64>}, {pipeline_mode = #tpu.pipeline_mode<synchronous>, transform_indices = @transform_2, window_bounds = array<i64: 1, 64>}, {pipeline_mode = #tpu.pipeline_mode<synchronous>, transform_indices = @transform_3, window_bounds = array<i64: 64, 128>}, {pipeline_mode = #tpu.pipeline_mode<synchronous>, transform_indices = @transform_4, window_bounds = array<i64: 1, 128>}, {transform_indices = @transform_5, window_bounds = array<i64: 16, 128>}]} {
    %c0 = arith.constant 0 : index
    %c0_0 = arith.constant 0 : index
    %0 = vector.load %arg1[%c0, %c0_0] : memref<16x4xf32, #tpu.memory_space<vmem>>, vector<16x4xf32>
    %c0_1 = arith.constant 0 : index
    %c0_2 = arith.constant 0 : index
    %1 = vector.load %arg2[%c0_1, %c0_2] : memref<4x64xf32, #tpu.memory_space<vmem>>, vector<4x64xf32>
    %c0_3 = arith.constant 0 : index
    %c0_4 = arith.constant 0 : index
    %2 = vector.load %arg3[%c0_3, %c0_4] : memref<1x64xf32, #tpu.memory_space<vmem>>, vector<1x64xf32>
    %3 = vector.extract_strided_slice %0 {offsets = [0, 0], sizes = [16, 1], strides = [1, 1]} : vector<16x4xf32> to vector<16x1xf32>
    %4 = vector.extract_strided_slice %1 {offsets = [0, 0], sizes = [1, 64], strides = [1, 1]} : vector<4x64xf32> to vector<1x64xf32>
    %5 = vector.broadcast %3 : vector<16x1xf32> to vector<16x64xf32>
    %6 = vector.broadcast %4 : vector<1x64xf32> to vector<16x64xf32>
    %7 = arith.mulf %5, %6 : vector<16x64xf32>
    %8 = vector.broadcast %2 : vector<1x64xf32> to vector<16x64xf32>
    %9 = arith.addf %8, %7 : vector<16x64xf32>
    %10 = vector.extract_strided_slice %0 {offsets = [0, 1], sizes = [16, 1], strides = [1, 1]} : vector<16x4xf32> to vector<16x1xf32>
    %11 = vector.extract_strided_slice %1 {offsets = [1, 0], sizes = [1, 64], strides = [1, 1]} : vector<4x64xf32> to vector<1x64xf32>
    %12 = vector.broadcast %10 : vector<16x1xf32> to vector<16x64xf32>
    %13 = vector.broadcast %11 : vector<1x64xf32> to vector<16x64xf32>
    %14 = arith.mulf %12, %13 : vector<16x64xf32>
    %15 = arith.addf %9, %14 : vector<16x64xf32>
    %16 = vector.extract_strided_slice %0 {offsets = [0, 2], sizes = [16, 1], strides = [1, 1]} : vector<16x4xf32> to vector<16x1xf32>
    %17 = vector.extract_strided_slice %1 {offsets = [2, 0], sizes = [1, 64], strides = [1, 1]} : vector<4x64xf32> to vector<1x64xf32>
    %18 = vector.broadcast %16 : vector<16x1xf32> to vector<16x64xf32>
    %19 = vector.broadcast %17 : vector<1x64xf32> to vector<16x64xf32>
    %20 = arith.mulf %18, %19 : vector<16x64xf32>
    %21 = arith.addf %15, %20 : vector<16x64xf32>
    %22 = vector.extract_strided_slice %0 {offsets = [0, 3], sizes = [16, 1], strides = [1, 1]} : vector<16x4xf32> to vector<16x1xf32>
    %23 = vector.extract_strided_slice %1 {offsets = [3, 0], sizes = [1, 64], strides = [1, 1]} : vector<4x64xf32> to vector<1x64xf32>
    %24 = vector.broadcast %22 : vector<16x1xf32> to vector<16x64xf32>
    %25 = vector.broadcast %23 : vector<1x64xf32> to vector<16x64xf32>
    %26 = arith.mulf %24, %25 : vector<16x64xf32>
    %27 = arith.addf %21, %26 : vector<16x64xf32>
    %cst = arith.constant 0.000000e+00 : f32
    %28 = vector.broadcast %cst : f32 to vector<16x64xf32>
    %29 = arith.maximumf %27, %28 : vector<16x64xf32>
    %c0_5 = arith.constant 0 : index
    %c0_6 = arith.constant 0 : index
    %30 = vector.load %arg4[%c0_5, %c0_6] : memref<64x128xf32, #tpu.memory_space<vmem>>, vector<64x128xf32>
    %cst_7 = arith.constant dense<0.000000e+00> : vector<16x128xf32>
    %31 = tpu.matmul %29, %30, %cst_7 {dimension_numbers = #tpu.dot_dimension_numbers<[1], [0], [0], [1], [0, 0, 1, 1], [], []>} : vector<16x64xf32>, vector<64x128xf32>, vector<16x128xf32> -> vector<16x128xf32>
    %c0_8 = arith.constant 0 : index
    %c0_9 = arith.constant 0 : index
    %32 = vector.load %arg5[%c0_8, %c0_9] : memref<1x128xf32, #tpu.memory_space<vmem>>, vector<1x128xf32>
    %33 = vector.broadcast %32 : vector<1x128xf32> to vector<16x128xf32>
    %34 = arith.addf %31, %33 : vector<16x128xf32>
    %c0_10 = arith.constant 0 : index
    %c0_11 = arith.constant 0 : index
    %35 = vector.load %arg6[%c0_10, %c0_11] : memref<16x128xf32, #tpu.memory_space<vmem>>, vector<16x128xf32>
    tpu.vector_store %arg6[%c0_10, %c0_11], %34 {strides = array<i32>} : memref<16x128xf32, #tpu.memory_space<vmem>>, vector<16x128xf32>,
    return
  }
  func.func @transform_0(%arg0: i32) -> (i32, i32) {
    %c0_i32 = arith.constant 0 : i32
    %c0_i32_0 = arith.constant 0 : i32
    return %arg0, %c0_i32 : i32, i32
  }
  func.func @transform_1(%arg0: i32) -> (i32, i32) {
    %c0_i32 = arith.constant 0 : i32
    %c0_i32_0 = arith.constant 0 : i32
    %c0_i32_1 = arith.constant 0 : i32
    return %c0_i32, %c0_i32_0 : i32, i32
  }
  func.func @transform_2(%arg0: i32) -> (i32, i32) {
    %c0_i32 = arith.constant 0 : i32
    %c0_i32_0 = arith.constant 0 : i32
    %c0_i32_1 = arith.constant 0 : i32
    return %c0_i32, %c0_i32_0 : i32, i32
  }
  func.func @transform_3(%arg0: i32) -> (i32, i32) {
    %c0_i32 = arith.constant 0 : i32
    %c0_i32_0 = arith.constant 0 : i32
    %c0_i32_1 = arith.constant 0 : i32
    return %c0_i32, %c0_i32_0 : i32, i32
  }
  func.func @transform_4(%arg0: i32) -> (i32, i32) {
    %c0_i32 = arith.constant 0 : i32
    %c0_i32_0 = arith.constant 0 : i32
    %c0_i32_1 = arith.constant 0 : i32
    return %c0_i32, %c0_i32_0 : i32, i32
  }
  func.func @transform_5(%arg0: i32) -> (i32, i32) {
    %c0_i32 = arith.constant 0 : i32
    %c0_i32_0 = arith.constant 0 : i32
    return %arg0, %c0_i32 : i32, i32
  }
}

</mosaic_0001>

<llo_original>
// kernel: tpu_custom_call.1
$region0: #{tpu_custom_call.1}
  #allocation0 [shape = 'u32[]', space=smem, size = 0x4, offset = 0x4, fixed_abs, tag = 'smem constant byte address 0x4 - core index']
  #allocation1 [shape = 'u32[144,128]{1,0:T(1,128)}', space=vmem, size = 0x12000, scoped, tag = 'internal scratch']
  %s0 = inlined_call_operand.vmem [shape: f32[16,4], index: 0, kind: input, shape index: {}]
  %s1 = inlined_call_operand.vmem [shape: f32[4,64], index: 1, kind: input, shape index: {}]
  %s2 = inlined_call_operand.vmem [shape: f32[1,64], index: 2, kind: input, shape index: {}]
  %s3 = inlined_call_operand.hbm [shape: f32[64,128], index: 3, kind: input, shape index: {}]
  %s4 = inlined_call_operand.vmem [shape: f32[1,128], index: 4, kind: input, shape index: {}]
  %s5 = inlined_call_operand.hbm [shape: f32[16,128], index: 5, kind: output, shape index: {}]
  %s6 = sld [smem:[#allocation0]]
  $region34: #{tpu_custom_call.1} parent=0
    _
  %s8 = ssub.s32 1, %s6
  %s9 = scalar_select 0, %s8, %s6
  $region1: #{tpu_custom_call.1} parent=0
    #allocation2 [shape = 'u8[32768]{0}', space=vmem, size = 0x8000, scoped, tag = 'input window, operand 3, single buffered']
    #allocation3 [shape = 's32[1]{0}', space=sflag, size = 0x4, scoped, tag = 'scoped memory for tpu_custom_call.1']
    #allocation4 [shape = 's32[1]{0}', space=sflag, size = 0x4, scoped, tag = 'scoped memory for tpu_custom_call.1']
    #allocation5 [shape = 'u8[8192]{0}', space=vmem, size = 0x2000, scoped, tag = 'output window, operand 0, single buffered']
    %10 = vsyncpa [#allocation3], 0
    %11 = vsyncpa [#allocation4], 0
    // Predicated region
    $region2: #{tpu_custom_call.1} parent=1 // pred_check
      _
    $region3: #{tpu_custom_call.1} parent=1 // pred_check_branch
      %13 = sbr.rel (0) target = $region5
    $region4: #{tpu_custom_call.1} parent=1 // pred_region
      _
    $region5: #{tpu_custom_call.1} parent=1 // pred_fallthru
      _
    // Predicated region
    $region6: #{tpu_custom_call.1} parent=1 // pred_check
      _
    $region7: #{tpu_custom_call.1} parent=1 // pred_check_branch
      %15 = sbr.rel (0) target = $region9
    $region8: #{tpu_custom_call.1} parent=1 // pred_region
      _
    $region9: #{tpu_custom_call.1} parent=1 // pred_fallthru
      _
    // Predicated region
    $region10: #{tpu_custom_call.1} parent=1 // pred_check
      _
    $region11: #{tpu_custom_call.1} parent=1 // pred_check_branch
      %17 = sbr.rel (0) target = $region13
    $region12: #{tpu_custom_call.1} parent=1 // pred_region
      _
    $region13: #{tpu_custom_call.1} parent=1 // pred_fallthru
      _
    // Predicated region
    $region14: #{tpu_custom_call.1} parent=1 // pred_check
      _
    $region15: #{tpu_custom_call.1} parent=1 // pred_check_branch
      %19 = sbr.rel (0) target = $region17
    $region16: #{tpu_custom_call.1} parent=1 // pred_region
      %s21 = ssub.s32 1024, 1024
      %22 = vsyncadd [#allocation3], %s21
      %s23 = sshll.u32 [#allocation2], 4
      %s24 = int_to_ptr.vmem [resolvable:$true] %s23
      %29 = dma.hbm_to_vmem [thread:$0]  %s3, 1024, %s24, [#allocation3], 128, 128, 8
    $region17: #{tpu_custom_call.1} parent=1 // pred_fallthru
      _
    // Predicated region
    $region18: #{tpu_custom_call.1} parent=1 // pred_check
      _
    $region19: #{tpu_custom_call.1} parent=1 // pred_check_branch
      %31 = sbr.rel (0) target = $region21
    $region20: #{tpu_custom_call.1} parent=1 // pred_region
      _
    $region21: #{tpu_custom_call.1} parent=1 // pred_fallthru
      _
    // Predicated region
    $region22: #{tpu_custom_call.1} parent=1 // pred_check
      _
    $region23: #{tpu_custom_call.1} parent=1 // pred_check_branch
      %33 = sbr.rel (0) target = $region25
    $region24: #{tpu_custom_call.1} parent=1 // pred_region
      %34 = dma.done [#allocation3], 1024
    $region25: #{tpu_custom_call.1} parent=1 // pred_fallthru
      _
    %v35 = vld [vmem:[%s0] sm:$0xff]
    %v36 = vld [vmem:[%s0 + $0x8] sm:$0xff]
    %v37 = vld [vmem:[%s1] sm:$0xf]
    %v38 = vld [vmem:[%s2] sm:$0x1]
    %40 = vset.pattern.permute.xlu0 0
    %41 = vperm.xlu0 %40, %v35
    %v42 = vpop.permute.xlu0 %41
    %45 = vset.pattern.permute.xlu0 0
    %46 = vperm.xlu0 %45, %v36
    %v47 = vpop.permute.xlu0 %46
    %v49 = vlaneseq
    %v50 = vshrl.u32 %v49, 7
    %v51 = vsub.s32 0, %v50
    %v52 = vrot.slane %v37, %v51
    %v53 = vmul.f32 %v42, %v52
    %v54 = vmul.f32 %v47, %v52
    %v56 = vlaneseq
    %v57 = vshrl.u32 %v56, 7
    %v58 = vsub.s32 0, %v57
    %v59 = vrot.slane %v38, %v58
    %v61 = vadd.f32 %v59, %v53
    %v62 = vadd.f32 %v59, %v54
    %63 = vset.pattern.permute.xlu0 1
    %64 = vperm.xlu0 %63, %v35
    %v65 = vpop.permute.xlu0 %64
    %67 = vset.pattern.permute.xlu0 1
    %68 = vperm.xlu0 %67, %v36
    %v69 = vpop.permute.xlu0 %68
    %v71 = vlaneseq
    %v72 = vshrl.u32 %v71, 7
    %v73 = vsub.s32 1, %v72
    %v74 = vrot.slane %v37, %v73
    %v75 = vmul.f32 %v65, %v74
    %v76 = vmul.f32 %v69, %v74
    %v77 = vadd.f32 %v61, %v75
    %v78 = vadd.f32 %v62, %v76
    %79 = vset.pattern.permute.xlu0 2
    %80 = vperm.xlu0 %79, %v35
    %v81 = vpop.permute.xlu0 %80
    %83 = vset.pattern.permute.xlu0 2
    %84 = vperm.xlu0 %83, %v36
    %v85 = vpop.permute.xlu0 %84
    %v87 = vlaneseq
    %v88 = vshrl.u32 %v87, 7
    %v89 = vsub.s32 2, %v88
    %v90 = vrot.slane %v37, %v89
    %v91 = vmul.f32 %v81, %v90
    %v92 = vmul.f32 %v85, %v90
    %v93 = vadd.f32 %v77, %v91
    %v94 = vadd.f32 %v78, %v92
    %95 = vset.pattern.permute.xlu0 3
    %96 = vperm.xlu0 %95, %v35
    %v97 = vpop.permute.xlu0 %96
    %99 = vset.pattern.permute.xlu0 3
    %100 = vperm.xlu0 %99, %v36
    %v101 = vpop.permute.xlu0 %100
    %v103 = vlaneseq
    %v104 = vshrl.u32 %v103, 7
    %v105 = vsub.s32 3, %v104
    %v106 = vrot.slane %v37, %v105
    %v107 = vmul.f32 %v97, %v106
    %v108 = vmul.f32 %v101, %v106
    %v109 = vadd.f32 %v93, %v107
    %v110 = vadd.f32 %v94, %v108
    %v111 = vmax.f32 %v109, 0.0
    %v112 = vmax.f32 %v110, 0.0
    %v113 = vld [vmem:[#allocation2] sm:$0xff]
    %v114 = vld [vmem:[#allocation2 + $0x8] sm:$0xff]
    %v115 = vld [vmem:[#allocation2 + $0x10] sm:$0xff]
    %v116 = vld [vmem:[#allocation2 + $0x18] sm:$0xff]
    %v117 = vld [vmem:[#allocation2 + $0x20] sm:$0xff]
    %v118 = vld [vmem:[#allocation2 + $0x28] sm:$0xff]
    %v119 = vld [vmem:[#allocation2 + $0x30] sm:$0xff]
    %v120 = vld [vmem:[#allocation2 + $0x38] sm:$0xff]
    %v121 = vld [vmem:[%s4] sm:$0x1]
    %v123 = vlaneseq
    %v124 = vshrl.u32 %v123, 7
    %v125 = vsub.s32 0, %v124
    %v126 = vrot.slane %v121, %v125
    %vm128 = vcmask 523264
    %v130 = vsel %vm128, %v111, 0
    %v133 = vsel %vm128, %v112, 0
    %135 = vmatprep.subr.mxu0 0.0
    %136 = vmatpush1.msra.mxu0 %v113
    %137 = vmatprep.subr.mxu0 0.0
    %138 = vmatpush1.msra.mxu0 %v114
    %139 = vmatprep.subr.mxu0 0.0
    %140 = vmatpush1.msra.mxu0 %v115
    %141 = vmatprep.subr.mxu0 0.0
    %142 = vmatpush1.msra.mxu0 %v116
    %143 = vmatprep.subr.mxu0 0.0
    %144 = vmatpush1.msra.mxu0 %v117
    %145 = vmatprep.subr.mxu0 0.0
    %146 = vmatpush1.msra.mxu0 %v118
    %147 = vmatprep.subr.mxu0 0.0
    %148 = vmatpush1.msra.mxu0 %v119
    %149 = vmatprep.subr.mxu0 0.0
    %150 = vmatpush1.msra.mxu0 %v120
    %151 = vmatprep.subr.mxu0 0.0
    %152 = vmatpush1.msra.mxu0 0.0
    %153 = vmatprep.subr.mxu0 0.0
    %154 = vmatpush1.msra.mxu0 0.0
    %155 = vmatprep.subr.mxu0 0.0
    %156 = vmatpush1.msra.mxu0 0.0
    %157 = vmatprep.subr.mxu0 0.0
    %158 = vmatpush1.msra.mxu0 0.0
    %159 = vmatprep.subr.mxu0 0.0
    %160 = vmatpush1.msra.mxu0 0.0
    %161 = vmatprep.subr.mxu0 0.0
    %162 = vmatpush1.msra.mxu0 0.0
    %163 = vmatprep.subr.mxu0 0.0
    %164 = vmatpush1.msra.mxu0 0.0
    %165 = vmatprep.subr.mxu0 0.0
    %166 = vmatpush1.msra.mxu0 0.0
    %167 = vmatprep.subr.mxu0 0.0
    %168 = vmatpush1.msra.mxu0 0.0
    %169 = vmatprep.subr.mxu0 0.0
    %170 = vmatpush1.msra.mxu0 0.0
    %171 = vmatprep.subr.mxu0 0.0
    %172 = vmatpush1.msra.mxu0 0.0
    %173 = vmatprep.subr.mxu0 0.0
    %174 = vmatpush1.msra.mxu0 0.0
    %175 = vmatprep.subr.mxu0 0.0
    %176 = vmatpush1.msra.mxu0 0.0
    %177 = vmatprep.subr.mxu0 0.0
    %178 = vmatpush1.msra.mxu0 0.0
    %179 = vmatprep.subr.mxu0 0.0
    %180 = vmatpush1.msra.mxu0 0.0
    %181 = vmatprep.subr.mxu0 0.0
    %182 = vmatpush1.msra.mxu0 0.0
    %183 = vmatprep.subr.mxu0 0.0
    %184 = vmatpush1.msra.mxu0 0.0
    %185 = vmatprep.subr.mxu0 0.0
    %186 = vmatpush1.msra.mxu0 0.0
    %187 = vmatprep.subr.mxu0 0.0
    %188 = vmatpush1.msra.mxu0 0.0
    %189 = vmatprep.subr.mxu0 0.0
    %190 = vmatpush1.msra.mxu0 0.0
    %191 = vmatprep.subr.mxu0 0.0
    %192 = vmatpush1.msra.mxu0 0.0
    %193 = vmatprep.subr.mxu0 0.0
    %194 = vmatpush1.msra.mxu0 0.0
    %195 = vmatprep.subr.mxu0 0.0
    %196 = vmatpush1.msra.mxu0 0.0
    %197 = vmatprep.subr.mxu0 0.0
    %198 = vmatpush1.msra.mxu0 0.0
    %199 = vmatprep.mubr.f32.mxu0 0.0
    %200 = vmatmul.mubr.f32.gmra.mrb[0].mxu0 %v130
    %v201 = vpop.f32.mrb[0].mxu0
    %v202 = vadd.f32 %v126, %v201
    %v203 = vpop.f32.mrb[0].mxu0
    %204 = vmatprep.mubr.f32.mxu0 0.0
    %205 = vmatmul.mubr.f32.gmra.mrb[0].mxu0 %v133
    %v206 = vpop.f32.mrb[0].mxu0
    %v207 = vadd.f32 %v126, %v206
    %v208 = vpop.f32.mrb[0].mxu0
    %209 = vdwg.mxu0
    %210 = vst [vmem:[#allocation5] sm:$0xff] %v202
    %211 = vst [vmem:[#allocation5 + $0x8] sm:$0xff] %v207
    // Predicated region
    $region26: #{tpu_custom_call.1} parent=1 // pred_check
      _
    $region27: #{tpu_custom_call.1} parent=1 // pred_check_branch
      %213 = sbr.rel (0) target = $region29
    $region28: #{tpu_custom_call.1} parent=1 // pred_region
      %s215 = ssub.s32 256, 256
      %216 = vsyncadd [#allocation4], %s215
      %s217 = sshll.u32 [#allocation5], 4
      %s218 = int_to_ptr.vmem [resolvable:$true] %s217
      %223 = dma.vmem_to_hbm [thread:$0]  %s218, 256, %s5, [#allocation4], 128, 128, 8
    $region29: #{tpu_custom_call.1} parent=1 // pred_fallthru
      _
    // Predicated region
    $region30: #{tpu_custom_call.1} parent=1 // pred_check
      _
    $region31: #{tpu_custom_call.1} parent=1 // pred_check_branch
      %225 = sbr.rel (0) target = $region33
    $region32: #{tpu_custom_call.1} parent=1 // pred_region
      %226 = dma.done [#allocation4], 256
    $region33: #{tpu_custom_call.1} parent=1 // pred_fallthru
      _
    %227 = vsyncpa [#allocation3], 1
    %228 = vsyncpa [#allocation4], 1

</llo_original>
